<compile_context>
chip_gen: v6e
topology: v6e:2x2x1
jax: 0.10.0
libtpu: 0.0.40
codegen_flags: <defaults>
</compile_context>

<pallas_src>
import jax
import jax.numpy as jnp
from jax.experimental import pallas as pl
from jax.experimental.pallas import tpu as pltpu


def _rff_kernel(x_ref, w1_ref, b1_ref, w2_ref, b2_ref, o_ref):
    # x_ref : (rows, fold*latent)          folded, lane-dense input tile
    # w1_ref: (fold*latent, fold*hidden)   block-diag weights, compute dtype
    # b1_ref: (1, fold*hidden)             f32
    # w2_ref: (fold*hidden, fold*latent)   block-diag weights, compute dtype
    # b2_ref: (1, fold*latent)             f32
    # o_ref : (rows, fold*latent)
    x = x_ref[...].astype(w1_ref.dtype)                       # MXU operand dtype
    h = jnp.dot(x, w1_ref[...], preferred_element_type=jnp.float32) + b1_ref[...]
    h = jnp.maximum(h, 0.0)                                    # f32 bias/ReLU on VPU
    z = jnp.dot(h.astype(w2_ref.dtype), w2_ref[...],
                preferred_element_type=jnp.float32) + b2_ref[...]
    o_ref[...] = z.astype(o_ref.dtype)


def _round_up(a, b):
    return (a + b - 1) // b * b


def rff_block(x, w1, b1, w2, b2, *, tm=8192, compute_dtype=jnp.bfloat16):
    """RFFBlock forward: relu(x @ w1.T + b1) @ w2.T + b2 along the last dim.

    x : [B, N, latent]
    w1: [hidden, latent], b1: [hidden]   (PyTorch nn.Linear conventions)
    w2: [latent, hidden], b2: [latent]
    tm: logical-row tile of the flattened [B*N, latent] view per grid step.
    compute_dtype: MXU operand dtype (accumulation is always f32).
      Pass jnp.float32 for full-precision matmul semantics.
    """
    B, N, latent = x.shape
    hidden = w1.shape[0]
    M = B * N

    # Fold `fold` consecutive logical rows into one 128-lane row so loads,
    # stores and VPU ops use all 128 lanes (lane-dense I/O).
    fold = 128 // latent if (latent < 128 and 128 % latent == 0) else 1
    row_align = 8 * fold                        # logical rows per (8,128) vreg tile
    tm = max(row_align, _round_up(tm, row_align))
    tm = min(tm, _round_up(M, row_align))       # don't over-pad tiny inputs
    m_pad = _round_up(M, tm)
    grid = m_pad // tm
    rows = tm // fold                           # folded rows per tile (mult. of 8)

    # Pad rows (instead of asserting divisibility); refold row-major -> free.
    x2 = x.reshape(M, latent)
    if m_pad != M:
        x2 = jnp.pad(x2, ((0, m_pad - M), (0, 0)))
    xf = x2.reshape(m_pad // fold, fold * latent)

    # Pre-transpose to [in, out]; replicate block-diagonally so the folded
    # lane-dense rows are handled by plain row-major matmuls on the MXU.
    w1_t = w1.T                                 # (latent, hidden)
    w2_t = w2.T                                 # (hidden, latent)
    b1_v, b2_v = b1, b2
    if fold > 1:
        eye = jnp.eye(fold, dtype=w1_t.dtype)
        w1_t = jnp.kron(eye, w1_t)              # (fold*latent, fold*hidden)
        w2_t = jnp.kron(eye, w2_t)              # (fold*hidden, fold*latent)
        b1_v = jnp.tile(b1, fold)
        b2_v = jnp.tile(b2, fold)
    w1_m = w1_t.astype(compute_dtype)
    w2_m = w2_t.astype(compute_dtype)
    b1_2 = b1_v.reshape(1, fold * hidden).astype(jnp.float32)
    b2_2 = b2_v.reshape(1, fold * latent).astype(jnp.float32)

    out = pl.pallas_call(
        _rff_kernel,
        out_shape=jax.ShapeDtypeStruct((m_pad // fold, fold * latent), x.dtype),
        grid_spec=pltpu.PrefetchScalarGridSpec(
            num_scalar_prefetch=0,
            grid=(grid,),
            in_specs=[
                pl.BlockSpec((rows, fold * latent), lambda i: (i, 0)),
                # Constant block index -> weights/biases are fetched into VMEM
                # once and stay resident across all grid steps (no re-DMA).
                pl.BlockSpec((fold * latent, fold * hidden), lambda i: (0, 0)),
                pl.BlockSpec((1, fold * hidden), lambda i: (0, 0)),
                pl.BlockSpec((fold * hidden, fold * latent), lambda i: (0, 0)),
                pl.BlockSpec((1, fold * latent), lambda i: (0, 0)),
            ],
            out_specs=pl.BlockSpec((rows, fold * latent), lambda i: (i, 0)),
        ),
        compiler_params=pltpu.CompilerParams(
            dimension_semantics=("parallel",)),   # lets v7x shard across 2 TCs
    )(xf, w1_m, b1_2, w2_m, b2_2)

    return out.reshape(m_pad, latent)[:M].reshape(B, N, latent)


def _init_linear(key, out_dim, in_dim, dtype=jnp.float32):
    # Deterministic init mimicking nn.Linear default (uniform +- 1/sqrt(in)).
    kw, kb = jax.random.split(key)
    bound = 1.0 / (in_dim ** 0.5)
    w = jax.random.uniform(kw, (out_dim, in_dim), dtype, -bound, bound)
    b = jax.random.uniform(kb, (out_dim,), dtype, -bound, bound)
    return w, b


def _reference(x, w1, b1, w2, b2):
    # Exact f32 math of the PyTorch module (Linear -> ReLU -> Linear).
    h = jnp.einsum("bnd,hd->bnh", x, w1,
                   preferred_element_type=jnp.float32) + b1
    h = jnp.maximum(h, 0.0)
    z = jnp.einsum("bnh,dh->bnd", h, w2,
                   preferred_element_type=jnp.float32) + b2
    return z.astype(x.dtype)


if __name__ == "__main__":
    # Small shapes consistent with the module: batch=2, set size=8,
    # latent_size=32, hidden_size=64, num_layers=2.
    B, N, latent, hidden = 2, 8, 32, 64

    key = jax.random.PRNGKey(0)
    kx, k1, k2 = jax.random.split(key, 3)

    x = jax.random.normal(kx, (B, N, latent), jnp.float32)
    w1, b1 = _init_linear(k1, hidden, latent)   # Linear(latent -> hidden)
    w2, b2 = _init_linear(k2, latent, hidden)   # Linear(hidden -> latent)

    z_ref = _reference(x, w1, b1, w2, b2)

    # f32-compute path: should match the module's math tightly.
    z_f32 = rff_block(x, w1, b1, w2, b2, compute_dtype=jnp.float32)
    z_f32 = jax.block_until_ready(z_f32)
    assert z_f32.shape == (B, N, latent)
    assert jnp.allclose(z_f32, z_ref, atol=2e-3, rtol=2e-3), "f32 kernel mismatch"

    # Default bf16-MXU path: looser tolerance vs exact f32 math.
    z_bf = rff_block(x, w1, b1, w2, b2)
    z_bf = jax.block_until_ready(z_bf)
    assert z_bf.shape == (B, N, latent)
    assert jnp.allclose(z_bf, z_ref, atol=5e-2, rtol=5e-2), "bf16 kernel mismatch"

    print("KERNEL_OK")
</pallas_src>

<mosaic_0001>
module attributes {stable_mosaic.version = 11 : i64} {
  func.func @_rff_kernel(%arg0: i32, %arg1: memref<8x128xf32, #tpu.memory_space<vmem>>, %arg2: memref<128x256xf32, #tpu.memory_space<vmem>>, %arg3: memref<1x256xf32, #tpu.memory_space<vmem>>, %arg4: memref<256x128xf32, #tpu.memory_space<vmem>>, %arg5: memref<1x128xf32, #tpu.memory_space<vmem>>, %arg6: memref<8x128xf32, #tpu.memory_space<vmem>>) attributes {dimension_semantics = [#tpu.dimension_semantics<parallel>], iteration_bounds = array<i64: 1>, scalar_prefetch = 0 : i64, scratch_operands = 0 : i64, tpu.core_type = #tpu.core_type<tc>, window_params = [{transform_indices = @transform_0, window_bounds = array<i64: 8, 128>}, {pipeline_mode = #tpu.pipeline_mode<synchronous>, transform_indices = @transform_1, window_bounds = array<i64: 128, 256>}, {pipeline_mode = #tpu.pipeline_mode<synchronous>, transform_indices = @transform_2, window_bounds = array<i64: 1, 256>}, {pipeline_mode = #tpu.pipeline_mode<synchronous>, transform_indices = @transform_3, window_bounds = array<i64: 256, 128>}, {pipeline_mode = #tpu.pipeline_mode<synchronous>, transform_indices = @transform_4, window_bounds = array<i64: 1, 128>}, {transform_indices = @transform_5, window_bounds = array<i64: 8, 128>}]} {
    %c0 = arith.constant 0 : index
    %c0_0 = arith.constant 0 : index
    %0 = vector.load %arg1[%c0, %c0_0] : memref<8x128xf32, #tpu.memory_space<vmem>>, vector<8x128xf32>
    %c0_1 = arith.constant 0 : index
    %c0_2 = arith.constant 0 : index
    %1 = vector.load %arg2[%c0_1, %c0_2] : memref<128x256xf32, #tpu.memory_space<vmem>>, vector<128x256xf32>
    %cst = arith.constant dense<0.000000e+00> : vector<8x256xf32>
    %2 = tpu.matmul %0, %1, %cst {dimension_numbers = #tpu.dot_dimension_numbers<[1], [0], [0], [1], [0, 0, 1, 1], [], []>} : vector<8x128xf32>, vector<128x256xf32>, vector<8x256xf32> -> vector<8x256xf32>
    %c0_3 = arith.constant 0 : index
    %c0_4 = arith.constant 0 : index
    %3 = vector.load %arg3[%c0_3, %c0_4] : memref<1x256xf32, #tpu.memory_space<vmem>>, vector<1x256xf32>
    %4 = vector.broadcast %3 : vector<1x256xf32> to vector<8x256xf32>
    %5 = arith.addf %2, %4 : vector<8x256xf32>
    %cst_5 = arith.constant 0.000000e+00 : f32
    %6 = vector.broadcast %cst_5 : f32 to vector<8x256xf32>
    %7 = arith.maximumf %5, %6 : vector<8x256xf32>
    %c0_6 = arith.constant 0 : index
    %c0_7 = arith.constant 0 : index
    %8 = vector.load %arg4[%c0_6, %c0_7] : memref<256x128xf32, #tpu.memory_space<vmem>>, vector<256x128xf32>
    %cst_8 = arith.constant dense<0.000000e+00> : vector<8x128xf32>
    %9 = tpu.matmul %7, %8, %cst_8 {dimension_numbers = #tpu.dot_dimension_numbers<[1], [0], [0], [1], [0, 0, 1, 1], [], []>} : vector<8x256xf32>, vector<256x128xf32>, vector<8x128xf32> -> vector<8x128xf32>
    %c0_9 = arith.constant 0 : index
    %c0_10 = arith.constant 0 : index
    %10 = vector.load %arg5[%c0_9, %c0_10] : memref<1x128xf32, #tpu.memory_space<vmem>>, vector<1x128xf32>
    %11 = vector.broadcast %10 : vector<1x128xf32> to vector<8x128xf32>
    %12 = arith.addf %9, %11 : vector<8x128xf32>
    %c0_11 = arith.constant 0 : index
    %c0_12 = arith.constant 0 : index
    %13 = vector.load %arg6[%c0_11, %c0_12] : memref<8x128xf32, #tpu.memory_space<vmem>>, vector<8x128xf32>
    tpu.vector_store %arg6[%c0_11, %c0_12], %12 {strides = array<i32>} : memref<8x128xf32, #tpu.memory_space<vmem>>, vector<8x128xf32>,
    return
  }
  func.func @transform_0(%arg0: i32) -> (i32, i32) {
    %c0_i32 = arith.constant 0 : i32
    %c0_i32_0 = arith.constant 0 : i32
    return %arg0, %c0_i32 : i32, i32
  }
  func.func @transform_1(%arg0: i32) -> (i32, i32) {
    %c0_i32 = arith.constant 0 : i32
    %c0_i32_0 = arith.constant 0 : i32
    %c0_i32_1 = arith.constant 0 : i32
    return %c0_i32, %c0_i32_0 : i32, i32
  }
  func.func @transform_2(%arg0: i32) -> (i32, i32) {
    %c0_i32 = arith.constant 0 : i32
    %c0_i32_0 = arith.constant 0 : i32
    %c0_i32_1 = arith.constant 0 : i32
    return %c0_i32, %c0_i32_0 : i32, i32
  }
  func.func @transform_3(%arg0: i32) -> (i32, i32) {
    %c0_i32 = arith.constant 0 : i32
    %c0_i32_0 = arith.constant 0 : i32
    %c0_i32_1 = arith.constant 0 : i32
    return %c0_i32, %c0_i32_0 : i32, i32
  }
  func.func @transform_4(%arg0: i32) -> (i32, i32) {
    %c0_i32 = arith.constant 0 : i32
    %c0_i32_0 = arith.constant 0 : i32
    %c0_i32_1 = arith.constant 0 : i32
    return %c0_i32, %c0_i32_0 : i32, i32
  }
  func.func @transform_5(%arg0: i32) -> (i32, i32) {
    %c0_i32 = arith.constant 0 : i32
    %c0_i32_0 = arith.constant 0 : i32
    return %arg0, %c0_i32 : i32, i32
  }
}

</mosaic_0001>

<llo_original>
// kernel: tpu_custom_call.1
$region0: #{tpu_custom_call.1}
  #allocation0 [shape = 'u32[]', space=smem, size = 0x4, offset = 0x4, fixed_abs, tag = 'smem constant byte address 0x4 - core index']
  #allocation1 [shape = 'u32[144,128]{1,0:T(1,128)}', space=vmem, size = 0x12000, scoped, tag = 'internal scratch']
  %s0 = inlined_call_operand.hbm [shape: f32[8,128], index: 0, kind: input, shape index: {}]
  %s1 = inlined_call_operand.hbm [shape: f32[128,256], index: 1, kind: input, shape index: {}]
  %s2 = inlined_call_operand.vmem [shape: f32[1,256], index: 2, kind: input, shape index: {}]
  %s3 = inlined_call_operand.hbm [shape: f32[256,128], index: 3, kind: input, shape index: {}]
  %s4 = inlined_call_operand.vmem [shape: f32[1,128], index: 4, kind: input, shape index: {}]
  %s5 = inlined_call_operand.hbm [shape: f32[8,128], index: 5, kind: output, shape index: {}]
  %s6 = sld [smem:[#allocation0]]
  $region42: #{tpu_custom_call.1} parent=0
    _
  %s8 = ssub.s32 1, %s6
  %s9 = scalar_select 0, %s8, %s6
  $region1: #{tpu_custom_call.1} parent=0
    #allocation2 [shape = 'u8[4096]{0}', space=vmem, size = 0x1000, scoped, tag = 'input window, operand 0, single buffered']
    #allocation3 [shape = 's32[1]{0}', space=sflag, size = 0x4, scoped, tag = 'scoped memory for tpu_custom_call.1']
    #allocation4 [shape = 's32[1]{0}', space=sflag, size = 0x4, scoped, tag = 'scoped memory for tpu_custom_call.1']
    #allocation5 [shape = 'u8[131072]{0}', space=vmem, size = 0x20000, scoped, tag = 'input window, operand 1, single buffered']
    #allocation6 [shape = 's32[1]{0}', space=sflag, size = 0x4, scoped, tag = 'scoped memory for tpu_custom_call.1']
    #allocation7 [shape = 'u8[131072]{0}', space=vmem, size = 0x20000, scoped, tag = 'input window, operand 3, single buffered']
    #allocation8 [shape = 'u8[4096]{0}', space=vmem, size = 0x1000, scoped, tag = 'output window, operand 0, single buffered']
    %10 = vsyncpa [#allocation3], 0
    %11 = vsyncpa [#allocation6], 0
    %12 = vsyncpa [#allocation4], 0
    // Predicated region
    $region2: #{tpu_custom_call.1} parent=1 // pred_check
      _
    $region3: #{tpu_custom_call.1} parent=1 // pred_check_branch
      %14 = sbr.rel (0) target = $region5
    $region4: #{tpu_custom_call.1} parent=1 // pred_region
      %s16 = ssub.s32 128, 128
      %17 = vsyncadd [#allocation3], %s16
      %s19 = sshll.u32 [#allocation2], 4
      %s20 = int_to_ptr.vmem [resolvable:$true] %s19
      %22 = dma.hbm_to_vmem [thread:$0]  %s0, 128, %s20, [#allocation3]
    $region5: #{tpu_custom_call.1} parent=1 // pred_fallthru
      _
    // Predicated region
    $region6: #{tpu_custom_call.1} parent=1 // pred_check
      _
    $region7: #{tpu_custom_call.1} parent=1 // pred_check_branch
      %24 = sbr.rel (0) target = $region9
    $region8: #{tpu_custom_call.1} parent=1 // pred_region
      %s26 = ssub.s32 4096, 4096
      %27 = vsyncadd [#allocation6], %s26
      %s28 = sshll.u32 [#allocation5], 4
      %s29 = int_to_ptr.vmem [resolvable:$true] %s28
      %34 = dma.hbm_to_vmem [thread:$0]  %s1, 4096, %s29, [#allocation6], 256, 256, 16
    $region9: #{tpu_custom_call.1} parent=1 // pred_fallthru
      _
    // Predicated region
    $region10: #{tpu_custom_call.1} parent=1 // pred_check
      _
    $region11: #{tpu_custom_call.1} parent=1 // pred_check_branch
      %36 = sbr.rel (0) target = $region13
    $region12: #{tpu_custom_call.1} parent=1 // pred_region
      _
    $region13: #{tpu_custom_call.1} parent=1 // pred_fallthru
      _
    // Predicated region
    $region14: #{tpu_custom_call.1} parent=1 // pred_check
      _
    $region15: #{tpu_custom_call.1} parent=1 // pred_check_branch
      %38 = sbr.rel (0) target = $region17
    $region16: #{tpu_custom_call.1} parent=1 // pred_region
      %s40 = ssub.s32 4096, 4096
      %41 = vsyncadd [#allocation6], %s40
      %s42 = sshll.u32 [#allocation7], 4
      %s43 = int_to_ptr.vmem [resolvable:$true] %s42
      %48 = dma.hbm_to_vmem [thread:$0]  %s3, 4096, %s43, [#allocation6], 128, 128, 8
    $region17: #{tpu_custom_call.1} parent=1 // pred_fallthru
      _
    // Predicated region
    $region18: #{tpu_custom_call.1} parent=1 // pred_check
      _
    $region19: #{tpu_custom_call.1} parent=1 // pred_check_branch
      %50 = sbr.rel (0) target = $region21
    $region20: #{tpu_custom_call.1} parent=1 // pred_region
      _
    $region21: #{tpu_custom_call.1} parent=1 // pred_fallthru
      _
    // Predicated region
    $region22: #{tpu_custom_call.1} parent=1 // pred_check
      _
    $region23: #{tpu_custom_call.1} parent=1 // pred_check_branch
      %52 = sbr.rel (0) target = $region25
    $region24: #{tpu_custom_call.1} parent=1 // pred_region
      %53 = dma.done [#allocation3], 128
    $region25: #{tpu_custom_call.1} parent=1 // pred_fallthru
      _
    // Predicated region
    $region26: #{tpu_custom_call.1} parent=1 // pred_check
      _
    $region27: #{tpu_custom_call.1} parent=1 // pred_check_branch
      %55 = sbr.rel (0) target = $region29
    $region28: #{tpu_custom_call.1} parent=1 // pred_region
      %56 = dma.done [#allocation6], 4096
    $region29: #{tpu_custom_call.1} parent=1 // pred_fallthru
      _
    // Predicated region
    $region30: #{tpu_custom_call.1} parent=1 // pred_check
      _
    $region31: #{tpu_custom_call.1} parent=1 // pred_check_branch
      %58 = sbr.rel (0) target = $region33
    $region32: #{tpu_custom_call.1} parent=1 // pred_region
      %59 = dma.done [#allocation6], 4096
    $region33: #{tpu_custom_call.1} parent=1 // pred_fallthru
      _
    %v60 = vld [vmem:[#allocation2] sm:$0xff]
    %v61 = vld [vmem:[#allocation5] sm:$0xff]
    %v62 = vld [vmem:[#allocation5 + $0x8] sm:$0xff]
    %v63 = vld [vmem:[#allocation5 + $0x10] sm:$0xff]
    %v64 = vld [vmem:[#allocation5 + $0x18] sm:$0xff]
    %v65 = vld [vmem:[#allocation5 + $0x20] sm:$0xff]
    %v66 = vld [vmem:[#allocation5 + $0x28] sm:$0xff]
    %v67 = vld [vmem:[#allocation5 + $0x30] sm:$0xff]
    %v68 = vld [vmem:[#allocation5 + $0x38] sm:$0xff]
    %v69 = vld [vmem:[#allocation5 + $0x40] sm:$0xff]
    %v70 = vld [vmem:[#allocation5 + $0x48] sm:$0xff]
    %v71 = vld [vmem:[#allocation5 + $0x50] sm:$0xff]
    %v72 = vld [vmem:[#allocation5 + $0x58] sm:$0xff]
    %v73 = vld [vmem:[#allocation5 + $0x60] sm:$0xff]
    %v74 = vld [vmem:[#allocation5 + $0x68] sm:$0xff]
    %v75 = vld [vmem:[#allocation5 + $0x70] sm:$0xff]
    %v76 = vld [vmem:[#allocation5 + $0x78] sm:$0xff]
    %v77 = vld [vmem:[#allocation5 + $0x80] sm:$0xff]
    %v78 = vld [vmem:[#allocation5 + $0x88] sm:$0xff]
    %v79 = vld [vmem:[#allocation5 + $0x90] sm:$0xff]
    %v80 = vld [vmem:[#allocation5 + $0x98] sm:$0xff]
    %v81 = vld [vmem:[#allocation5 + $0xa0] sm:$0xff]
    %v82 = vld [vmem:[#allocation5 + $0xa8] sm:$0xff]
    %v83 = vld [vmem:[#allocation5 + $0xb0] sm:$0xff]
    %v84 = vld [vmem:[#allocation5 + $0xb8] sm:$0xff]
    %v85 = vld [vmem:[#allocation5 + $0xc0] sm:$0xff]
    %v86 = vld [vmem:[#allocation5 + $0xc8] sm:$0xff]
    %v87 = vld [vmem:[#allocation5 + $0xd0] sm:$0xff]
    %v88 = vld [vmem:[#allocation5 + $0xd8] sm:$0xff]
    %v89 = vld [vmem:[#allocation5 + $0xe0] sm:$0xff]
    %v90 = vld [vmem:[#allocation5 + $0xe8] sm:$0xff]
    %v91 = vld [vmem:[#allocation5 + $0xf0] sm:$0xff]
    %v92 = vld [vmem:[#allocation5 + $0xf8] sm:$0xff]
    %v93 = vld [vmem:[%s2] sm:$0x3]
    %v95 = vlaneseq
    %v96 = vshrl.u32 %v95, 7
    %v97 = vsub.s32 0, %v96
    %v98 = vrot.slane %v93, %v97
    %v99 = vlaneseq
    %v100 = vshrl.u32 %v99, 7
    %v101 = vsub.s32 1, %v100
    %v102 = vrot.slane %v93, %v101
    %105 = vmatprep.subr.mxu0 %v92
    %106 = vmatpush1.msra.mxu0 %v91
    %107 = vmatprep.subr.mxu0 %v90
    %108 = vmatpush1.msra.mxu0 %v89
    %109 = vmatprep.subr.mxu0 %v88
    %110 = vmatpush1.msra.mxu0 %v87
    %111 = vmatprep.subr.mxu0 %v86
    %112 = vmatpush1.msra.mxu0 %v85
    %113 = vmatprep.subr.mxu0 %v84
    %114 = vmatpush1.msra.mxu0 %v83
    %115 = vmatprep.subr.mxu0 %v82
    %116 = vmatpush1.msra.mxu0 %v81
    %117 = vmatprep.subr.mxu0 %v80
    %118 = vmatpush1.msra.mxu0 %v79
    %119 = vmatprep.subr.mxu0 %v78
    %120 = vmatpush1.msra.mxu0 %v77
    %121 = vmatprep.subr.mxu0 %v76
    %122 = vmatpush1.msra.mxu0 %v75
    %123 = vmatprep.subr.mxu0 %v74
    %124 = vmatpush1.msra.mxu0 %v73
    %125 = vmatprep.subr.mxu0 %v72
    %126 = vmatpush1.msra.mxu0 %v71
    %127 = vmatprep.subr.mxu0 %v70
    %128 = vmatpush1.msra.mxu0 %v69
    %129 = vmatprep.subr.mxu0 %v68
    %130 = vmatpush1.msra.mxu0 %v67
    %131 = vmatprep.subr.mxu0 %v66
    %132 = vmatpush1.msra.mxu0 %v65
    %133 = vmatprep.subr.mxu0 %v64
    %134 = vmatpush1.msra.mxu0 %v63
    %135 = vmatprep.subr.mxu0 %v62
    %136 = vmatpush1.msra.mxu0 %v61
    %137 = vmatprep.subr.mxu0 0.0
    %138 = vmatpush2.msra.mxu0 0.0
    %139 = vmatprep.subr.mxu0 0.0
    %140 = vmatpush2.msra.mxu0 0.0
    %141 = vmatprep.subr.mxu0 0.0
    %142 = vmatpush2.msra.mxu0 0.0
    %143 = vmatprep.subr.mxu0 0.0
    %144 = vmatpush2.msra.mxu0 0.0
    %145 = vmatprep.subr.mxu0 0.0
    %146 = vmatpush2.msra.mxu0 0.0
    %147 = vmatprep.subr.mxu0 0.0
    %148 = vmatpush2.msra.mxu0 0.0
    %149 = vmatprep.subr.mxu0 0.0
    %150 = vmatpush2.msra.mxu0 0.0
    %151 = vmatprep.subr.mxu0 0.0
    %152 = vmatpush2.msra.mxu0 0.0
    %153 = vmatprep.subr.mxu0 0.0
    %154 = vmatpush2.msra.mxu0 0.0
    %155 = vmatprep.subr.mxu0 0.0
    %156 = vmatpush2.msra.mxu0 0.0
    %157 = vmatprep.subr.mxu0 0.0
    %158 = vmatpush2.msra.mxu0 0.0
    %159 = vmatprep.subr.mxu0 0.0
    %160 = vmatpush2.msra.mxu0 0.0
    %161 = vmatprep.subr.mxu0 0.0
    %162 = vmatpush2.msra.mxu0 0.0
    %163 = vmatprep.subr.mxu0 0.0
    %164 = vmatpush2.msra.mxu0 0.0
    %165 = vmatprep.subr.mxu0 0.0
    %166 = vmatpush2.msra.mxu0 0.0
    %167 = vmatprep.subr.mxu0 0.0
    %168 = vmatpush2.msra.mxu0 0.0
    %169 = vmatprep.mubr.f32.mxu0 0.0
    %170 = vmatmul.mubr.f32.gmra.mxu0 %v60
    %v171 = vpop.f32.mrf.mxu0
    %v172 = vadd.f32 %v98, %v171
    %v173 = vpop.f32.mrf.mxu0
    %v174 = vadd.f32 %v102, %v173
    %175 = vdwg.mxu0
    %v176 = vmax.f32 %v172, 0.0
    %v177 = vmax.f32 %v174, 0.0
    %v178 = vld [vmem:[#allocation7] sm:$0xff]
    %v179 = vld [vmem:[#allocation7 + $0x8] sm:$0xff]
    %v180 = vld [vmem:[#allocation7 + $0x10] sm:$0xff]
    %v181 = vld [vmem:[#allocation7 + $0x18] sm:$0xff]
    %v182 = vld [vmem:[#allocation7 + $0x20] sm:$0xff]
    %v183 = vld [vmem:[#allocation7 + $0x28] sm:$0xff]
    %v184 = vld [vmem:[#allocation7 + $0x30] sm:$0xff]
    %v185 = vld [vmem:[#allocation7 + $0x38] sm:$0xff]
    %v186 = vld [vmem:[#allocation7 + $0x40] sm:$0xff]
    %v187 = vld [vmem:[#allocation7 + $0x48] sm:$0xff]
    %v188 = vld [vmem:[#allocation7 + $0x50] sm:$0xff]
    %v189 = vld [vmem:[#allocation7 + $0x58] sm:$0xff]
    %v190 = vld [vmem:[#allocation7 + $0x60] sm:$0xff]
    %v191 = vld [vmem:[#allocation7 + $0x68] sm:$0xff]
    %v192 = vld [vmem:[#allocation7 + $0x70] sm:$0xff]
    %v193 = vld [vmem:[#allocation7 + $0x78] sm:$0xff]
    %v194 = vld [vmem:[#allocation7 + $0x80] sm:$0xff]
    %v195 = vld [vmem:[#allocation7 + $0x88] sm:$0xff]
    %v196 = vld [vmem:[#allocation7 + $0x90] sm:$0xff]
    %v197 = vld [vmem:[#allocation7 + $0x98] sm:$0xff]
    %v198 = vld [vmem:[#allocation7 + $0xa0] sm:$0xff]
    %v199 = vld [vmem:[#allocation7 + $0xa8] sm:$0xff]
    %v200 = vld [vmem:[#allocation7 + $0xb0] sm:$0xff]
    %v201 = vld [vmem:[#allocation7 + $0xb8] sm:$0xff]
    %v202 = vld [vmem:[#allocation7 + $0xc0] sm:$0xff]
    %v203 = vld [vmem:[#allocation7 + $0xc8] sm:$0xff]
    %v204 = vld [vmem:[#allocation7 + $0xd0] sm:$0xff]
    %v205 = vld [vmem:[#allocation7 + $0xd8] sm:$0xff]
    %v206 = vld [vmem:[#allocation7 + $0xe0] sm:$0xff]
    %v207 = vld [vmem:[#allocation7 + $0xe8] sm:$0xff]
    %v208 = vld [vmem:[#allocation7 + $0xf0] sm:$0xff]
    %v209 = vld [vmem:[#allocation7 + $0xf8] sm:$0xff]
    %v210 = vld [vmem:[%s4] sm:$0x1]
    %v212 = vlaneseq
    %v213 = vshrl.u32 %v212, 7
    %v214 = vsub.s32 0, %v213
    %v215 = vrot.slane %v210, %v214
    %217 = vmatprep.subr.mxu0 0.0
    %218 = vmatpush1.msra.mxu0 %v193
    %219 = vmatprep.subr.mxu0 0.0
    %220 = vmatpush1.msra.mxu0 %v192
    %221 = vmatprep.subr.mxu0 0.0
    %222 = vmatpush1.msra.mxu0 %v191
    %223 = vmatprep.subr.mxu0 0.0
    %224 = vmatpush1.msra.mxu0 %v190
    %225 = vmatprep.subr.mxu0 0.0
    %226 = vmatpush1.msra.mxu0 %v189
    %227 = vmatprep.subr.mxu0 0.0
    %228 = vmatpush1.msra.mxu0 %v188
    %229 = vmatprep.subr.mxu0 0.0
    %230 = vmatpush1.msra.mxu0 %v187
    %231 = vmatprep.subr.mxu0 0.0
    %232 = vmatpush1.msra.mxu0 %v186
    %233 = vmatprep.subr.mxu0 0.0
    %234 = vmatpush1.msra.mxu0 %v185
    %235 = vmatprep.subr.mxu0 0.0
    %236 = vmatpush1.msra.mxu0 %v184
    %237 = vmatprep.subr.mxu0 0.0
    %238 = vmatpush1.msra.mxu0 %v183
    %239 = vmatprep.subr.mxu0 0.0
    %240 = vmatpush1.msra.mxu0 %v182
    %241 = vmatprep.subr.mxu0 0.0
    %242 = vmatpush1.msra.mxu0 %v181
    %243 = vmatprep.subr.mxu0 0.0
    %244 = vmatpush1.msra.mxu0 %v180
    %245 = vmatprep.subr.mxu0 0.0
    %246 = vmatpush1.msra.mxu0 %v179
    %247 = vmatprep.subr.mxu0 0.0
    %248 = vmatpush1.msra.mxu0 %v178
    %249 = vmatprep.subr.mxu0 0.0
    %250 = vmatpush2.msra.mxu0 %v209
    %251 = vmatprep.subr.mxu0 0.0
    %252 = vmatpush2.msra.mxu0 %v208
    %253 = vmatprep.subr.mxu0 0.0
    %254 = vmatpush2.msra.mxu0 %v207
    %255 = vmatprep.subr.mxu0 0.0
    %256 = vmatpush2.msra.mxu0 %v206
    %257 = vmatprep.subr.mxu0 0.0
    %258 = vmatpush2.msra.mxu0 %v205
    %259 = vmatprep.subr.mxu0 0.0
    %260 = vmatpush2.msra.mxu0 %v204
    %261 = vmatprep.subr.mxu0 0.0
    %262 = vmatpush2.msra.mxu0 %v203
    %263 = vmatprep.subr.mxu0 0.0
    %264 = vmatpush2.msra.mxu0 %v202
    %265 = vmatprep.subr.mxu0 0.0
    %266 = vmatpush2.msra.mxu0 %v201
    %267 = vmatprep.subr.mxu0 0.0
    %268 = vmatpush2.msra.mxu0 %v200
    %269 = vmatprep.subr.mxu0 0.0
    %270 = vmatpush2.msra.mxu0 %v199
    %271 = vmatprep.subr.mxu0 0.0
    %272 = vmatpush2.msra.mxu0 %v198
    %273 = vmatprep.subr.mxu0 0.0
    %274 = vmatpush2.msra.mxu0 %v197
    %275 = vmatprep.subr.mxu0 0.0
    %276 = vmatpush2.msra.mxu0 %v196
    %277 = vmatprep.subr.mxu0 0.0
    %278 = vmatpush2.msra.mxu0 %v195
    %279 = vmatprep.subr.mxu0 0.0
    %280 = vmatpush2.msra.mxu0 %v194
    %281 = vmatprep.mubr.f32.mxu0 %v177
    %282 = vmatmul.mubr.f32.gmra.mxu0 %v176
    %v283 = vpop.f32.mrf.mxu0
    %v284 = vadd.f32 %v215, %v283
    %v285 = vpop.f32.mrf.mxu0
    %286 = vdwg.mxu0
    %287 = vst [vmem:[#allocation8] sm:$0xff] %v284
    // Predicated region
    $region34: #{tpu_custom_call.1} parent=1 // pred_check
      _
    $region35: #{tpu_custom_call.1} parent=1 // pred_check_branch
      %289 = sbr.rel (0) target = $region37
    $region36: #{tpu_custom_call.1} parent=1 // pred_region
      %s291 = ssub.s32 128, 128
      %292 = vsyncadd [#allocation4], %s291
      %s294 = sshll.u32 [#allocation8], 4
      %s295 = int_to_ptr.vmem [resolvable:$true] %s294
      %297 = dma.vmem_to_hbm [thread:$0]  %s295, 128, %s5, [#allocation4]
    $region37: #{tpu_custom_call.1} parent=1 // pred_fallthru
      _
    // Predicated region
    $region38: #{tpu_custom_call.1} parent=1 // pred_check
      _
    $region39: #{tpu_custom_call.1} parent=1 // pred_check_branch
      %299 = sbr.rel (0) target = $region41
    $region40: #{tpu_custom_call.1} parent=1 // pred_region
      %300 = dma.done [#allocation4], 128
    $region41: #{tpu_custom_call.1} parent=1 // pred_fallthru
      _
    %301 = vsyncpa [#allocation3], 1
    %302 = vsyncpa [#allocation6], 1
    %303 = vsyncpa [#allocation4], 1

</llo_original>
